<compile_context>
chip_gen: v7x
topology: tpu7x:2x2x1
jax: 0.10.0
libtpu: 0.0.40
codegen_flags: <defaults>
</compile_context>

<pallas_src>
import math
import numpy as np
import jax
import jax.numpy as jnp
from jax.experimental import pallas as pl
from jax.experimental.pallas import tpu as pltpu


def cosine_beta_schedule(timesteps, s=0.008):
    steps = timesteps + 1
    x = np.linspace(0, timesteps, steps, dtype=np.float64)
    alphas_cumprod = np.cos((x / timesteps + s) / (1 + s) * math.pi * 0.5) ** 2
    alphas_cumprod = alphas_cumprod / alphas_cumprod[0]
    betas = 1.0 - alphas_cumprod[1:] / alphas_cumprod[:-1]
    return np.clip(betas, 0.0, 0.999)


def _pick_b_blk(batch):
    """Samples per row-block: keep >= 2 row blocks for the parallel axis (v7x 2 TCs)
    while bounding the in-kernel static unroll."""
    for cand in (8, 4, 2):
        if batch % cand == 0 and batch // cand >= 2:
            return cand
    return 1


def _pick_hw_tile(hw, rows, itemsize, budget=2 * 1024 * 1024):
    """Largest lane-dense HW tile (multiple of 128) dividing HW that keeps one pipeline
    buffer under `budget` bytes, preferring >= 2 grid steps so the double-buffered DMA
    pipeline actually overlaps."""
    fallback = None
    for t in (2048, 1024, 512, 256, 128):
        if hw % t != 0:
            continue
        if rows * t * itemsize > budget:
            continue
        if hw // t >= 2:
            return t
        if fallback is None:
            fallback = t
    if fallback is not None:
        return fallback
    return 128 if hw % 128 == 0 else hw


def _p_losses_kernel(img_ref,                      # VMEM (b_blk, C, T)   image tile
                     noise_ref,                    # VMEM (b_blk, C, T)   gaussian noise tile
                     sa_ref, soma_ref, p2_ref,     # VMEM (b_blk, 1, 1)   per-sample coeffs
                     w_ref,                        # VMEM (C, C)          1x1-conv weight
                     bias_ref,                     # VMEM (C, 1)          conv bias
                     out_ref):                     # VMEM (b_blk, C, L)   lane-dense partial-loss acc
    j = pl.program_id(1)                           # HW (reduction) axis, last + "arbitrary"

    @pl.when(j == 0)
    def _():
        out_ref[...] = jnp.zeros_like(out_ref)

    w = w_ref[...]                                 # (C, C)  tiny, lives in vregs
    bias = bias_ref[...]                           # (C, 1)

    b_blk = img_ref.shape[0]
    hw_tile = img_ref.shape[-1]
    acc_lanes = out_ref.shape[-1]
    n_slab = hw_tile // acc_lanes

    for bb in range(b_blk):                        # static unroll over samples in this block
        noise = noise_ref[bb].astype(jnp.float32)                 # (C, T)
        x0 = img_ref[bb].astype(jnp.float32) * 2.0 - 1.0          # normalize_to_neg_one_to_one
        x_t = sa_ref[bb] * x0 + soma_ref[bb] * noise              # q_sample ((1,1) bcast, VPU)

        # Synthetic denoiser: pointwise (1x1) conv C->C == one small (C,C)@(C,T) dot.
        # FLOPs ~ 2*C^2*T per sample; fully hidden under the HBM roofline.
        model_out = jnp.dot(w, x_t, preferred_element_type=jnp.float32) + bias

        # objective='pred_noise', loss_type='l1'; p2 weight folded per sample, unscaled.
        wabs = jnp.abs(model_out - noise) * p2_ref[bb]             # (C, T)

        # Lane-aligned partial reduction: sum 128-wide slabs with plain VPU adds into a
        # lane-dense accumulator; the single cross-lane reduce is deferred to the wrapper.
        acc = wabs[:, 0:acc_lanes]
        for k in range(1, n_slab):
            acc = acc + wabs[:, k * acc_lanes:(k + 1) * acc_lanes]

        out_ref[bb] += acc                                         # full-tile RMW, no masking


class GaussianDiffusionPallas:
    def __init__(self, image_size, channels=4, timesteps=1000,
                 p2_loss_weight_gamma=0.0, p2_loss_weight_k=1, seed=42):
        self.image_size = image_size
        self.channels = channels
        self.num_timesteps = timesteps

        betas = cosine_beta_schedule(timesteps)          # float64
        alphas = 1.0 - betas
        alphas_cumprod = np.cumprod(alphas, axis=0)

        self.sqrt_alphas_cumprod = jnp.asarray(np.sqrt(alphas_cumprod), jnp.float32)
        self.sqrt_one_minus_alphas_cumprod = jnp.asarray(
            np.sqrt(1.0 - alphas_cumprod), jnp.float32)
        self.p2_loss_weight = jnp.asarray(
            (p2_loss_weight_k + alphas_cumprod / (1.0 - alphas_cumprod))
            ** (-p2_loss_weight_gamma), jnp.float32)

        # deterministic synthetic denoiser weights (1x1 conv, C->C)
        wkey = jax.random.PRNGKey(seed)
        self.w = (jax.random.normal(wkey, (channels, channels), jnp.float32)
                  / math.sqrt(channels))
        self.bias = jnp.zeros((channels, 1), jnp.float32)

    def forward(self, img, key):
        b, c, h, w = img.shape
        assert h == self.image_size and w == self.image_size, \
            f'height and width of image must be {self.image_size}'
        assert c == self.channels

        t_key, n_key = jax.random.split(key)
        t = jax.random.randint(t_key, (b,), 0, self.num_timesteps)

        # per-sample schedule coefficients (gather glue stays in JAX)
        sa = self.sqrt_alphas_cumprod[t].reshape(b, 1, 1)                # (B,1,1)
        soma = self.sqrt_one_minus_alphas_cumprod[t].reshape(b, 1, 1)    # (B,1,1)
        p2w = self.p2_loss_weight[t].reshape(b, 1, 1)                    # (B,1,1)

        hw = h * w
        # free reshape of contiguous NCHW (no transpose); image keeps its native dtype
        img3 = img.reshape(b, c, hw)
        # TODO(synk): pltpu.prng_seed/stateful_normal would generate this on-chip (saves
        # one image-sized HBM stream) but has no interpret-mode lowering, so draw it here.
        noise = jax.random.normal(n_key, (b, c, hw), dtype=jnp.float32)

        b_blk = _pick_b_blk(b)
        nb = b // b_blk
        rows = b_blk * c
        hw_tile = _pick_hw_tile(hw, rows, 4)
        n_hw = hw // hw_tile
        acc_lanes = 128 if hw_tile % 128 == 0 else hw_tile

        # generation-aware VMEM budget: 2 double-buffered input streams + in-flight f32
        # temporaries + constants/slack, clamped well under v7x's 64 MiB physical VMEM.
        img_itemsize = jnp.dtype(img3.dtype).itemsize
        vmem_bytes = (2 * rows * hw_tile * img_itemsize   # image, double-buffered
                      + 2 * rows * hw_tile * 4            # noise, double-buffered
                      + 6 * rows * hw_tile * 4            # live f32 temporaries
                      + (1 << 20))                        # constants / output / slack
        vmem_limit = int(min(max(vmem_bytes, 16 << 20), 48 << 20))

        partials = pl.pallas_call(
            _p_losses_kernel,
            out_shape=jax.ShapeDtypeStruct((b, c, acc_lanes), jnp.float32),
            grid=(nb, n_hw),
            in_specs=[
                pl.BlockSpec((b_blk, c, hw_tile), lambda i, j: (i, 0, j)),   # image tile
                pl.BlockSpec((b_blk, c, hw_tile), lambda i, j: (i, 0, j)),   # noise tile
                pl.BlockSpec((b_blk, 1, 1), lambda i, j: (i, 0, 0)),         # sqrt_ac[t]
                pl.BlockSpec((b_blk, 1, 1), lambda i, j: (i, 0, 0)),         # sqrt(1-ac)[t]
                pl.BlockSpec((b_blk, 1, 1), lambda i, j: (i, 0, 0)),         # p2 weight
                pl.BlockSpec((c, c), lambda i, j: (0, 0)),                   # conv weight
                pl.BlockSpec((c, 1), lambda i, j: (0, 0)),                   # conv bias
            ],
            # lane-dense per-sample partial-loss accumulator, resident across the HW axis
            out_specs=pl.BlockSpec((b_blk, c, acc_lanes), lambda i, j: (i, 0, 0)),
            compiler_params=pltpu.CompilerParams(
                dimension_semantics=("parallel", "arbitrary"),   # sample blocks || HW reduce
                vmem_limit_bytes=vmem_limit,
            ),
        )(img3, noise, sa, soma, p2w, self.w, self.bias)

        # single final reduce + mean normalization (kept out of the per-step hot path)
        return jnp.sum(partials) / float(b * c * h * w)


if __name__ == "__main__":
    B, C, H, W = 2, 4, 16, 16
    key = jax.random.PRNGKey(0)
    img_key, fwd_key = jax.random.split(key)
    # images in [0, 1] (forward normalizes to [-1, 1] itself)
    img = jax.random.uniform(img_key, (B, C, H, W), jnp.float32)

    gd = GaussianDiffusionPallas(image_size=H, channels=C, timesteps=1000)
    loss = gd.forward(img, fwd_key)
    loss = jax.block_until_ready(loss)
    assert loss.shape == () and bool(jnp.isfinite(loss))
    print("KERNEL_OK")
</pallas_src>

<mosaic_0001>
module attributes {stable_mosaic.version = 11 : i64} {
  func.func @_p_losses_kernel(%arg0: i32, %arg1: i32, %arg2: memref<1x4x128xf32, #tpu.memory_space<vmem>>, %arg3: memref<1x4x128xf32, #tpu.memory_space<vmem>>, %arg4: memref<1x1x1xf32, #tpu.memory_space<vmem>>, %arg5: memref<1x1x1xf32, #tpu.memory_space<vmem>>, %arg6: memref<1x1x1xf32, #tpu.memory_space<vmem>>, %arg7: memref<4x4xf32, #tpu.memory_space<vmem>>, %arg8: memref<4x1xf32, #tpu.memory_space<vmem>>, %arg9: memref<1x4x128xf32, #tpu.memory_space<vmem>>) attributes {dimension_semantics = [#tpu.dimension_semantics<parallel>, #tpu.dimension_semantics<arbitrary>], iteration_bounds = array<i64: 2, 2>, scalar_prefetch = 0 : i64, scratch_operands = 0 : i64, tpu.core_type = #tpu.core_type<tc>, window_params = [{transform_indices = @transform_0, window_bounds = array<i64: 1, 4, 128>}, {transform_indices = @transform_1, window_bounds = array<i64: 1, 4, 128>}, {transform_indices = @transform_2, window_bounds = array<i64: 1, 1, 1>}, {transform_indices = @transform_3, window_bounds = array<i64: 1, 1, 1>}, {transform_indices = @transform_4, window_bounds = array<i64: 1, 1, 1>}, {pipeline_mode = #tpu.pipeline_mode<synchronous>, transform_indices = @transform_5, window_bounds = array<i64: 4, 4>}, {pipeline_mode = #tpu.pipeline_mode<synchronous>, transform_indices = @transform_6, window_bounds = array<i64: 4, 1>}, {transform_indices = @transform_7, window_bounds = array<i64: 1, 4, 128>}]} {
    %c0_i32 = arith.constant 0 : i32
    %0 = arith.cmpi eq, %arg1, %c0_i32 : i32
    %1 = arith.extui %0 : i1 to i32
    %c0_i32_0 = arith.constant 0 : i32
    %2 = arith.cmpi ne, %1, %c0_i32_0 : i32
    scf.if %2 {
      %cst_27 = arith.constant 0.000000e+00 : f32
      %37 = vector.broadcast %cst_27 : f32 to vector<1x4x128xf32>
      %c0_28 = arith.constant 0 : index
      %c0_29 = arith.constant 0 : index
      %c0_30 = arith.constant 0 : index
      %38 = vector.load %arg9[%c0_28, %c0_29, %c0_30] : memref<1x4x128xf32, #tpu.memory_space<vmem>>, vector<1x4x128xf32>
      tpu.vector_store %arg9[%c0_28, %c0_29, %c0_30], %37 {strides = array<i32>} : memref<1x4x128xf32, #tpu.memory_space<vmem>>, vector<1x4x128xf32>,
    } else {
    }
    %c0 = arith.constant 0 : index
    %c0_1 = arith.constant 0 : index
    %3 = vector.load %arg7[%c0, %c0_1] : memref<4x4xf32, #tpu.memory_space<vmem>>, vector<4x4xf32>
    %c0_2 = arith.constant 0 : index
    %c0_3 = arith.constant 0 : index
    %4 = vector.load %arg8[%c0_2, %c0_3] : memref<4x1xf32, #tpu.memory_space<vmem>>, vector<4x1xf32>
    %c0_4 = arith.constant 0 : index
    %c0_5 = arith.constant 0 : index
    %c0_6 = arith.constant 0 : index
    %5 = vector.load %arg3[%c0_4, %c0_5, %c0_6] : memref<1x4x128xf32, #tpu.memory_space<vmem>>, vector<1x4x128xf32>
    %6 = vector.shape_cast %5 : vector<1x4x128xf32> to vector<4x128xf32>
    %c0_7 = arith.constant 0 : index
    %c0_8 = arith.constant 0 : index
    %c0_9 = arith.constant 0 : index
    %7 = vector.load %arg2[%c0_7, %c0_8, %c0_9] : memref<1x4x128xf32, #tpu.memory_space<vmem>>, vector<1x4x128xf32>
    %8 = vector.shape_cast %7 : vector<1x4x128xf32> to vector<4x128xf32>
    %cst = arith.constant 2.000000e+00 : f32
    %9 = vector.broadcast %cst : f32 to vector<4x128xf32>
    %10 = arith.mulf %8, %9 : vector<4x128xf32>
    %cst_10 = arith.constant 1.000000e+00 : f32
    %11 = vector.broadcast %cst_10 : f32 to vector<4x128xf32>
    %12 = arith.subf %10, %11 : vector<4x128xf32>
    %c0_11 = arith.constant 0 : index
    %c0_12 = arith.constant 0 : index
    %c0_13 = arith.constant 0 : index
    %13 = vector.load %arg4[%c0_11, %c0_12, %c0_13] : memref<1x1x1xf32, #tpu.memory_space<vmem>>, vector<1x1x1xf32>
    %14 = vector.shape_cast %13 : vector<1x1x1xf32> to vector<1x1xf32>
    %15 = vector.broadcast %14 : vector<1x1xf32> to vector<4x128xf32>
    %16 = arith.mulf %15, %12 : vector<4x128xf32>
    %c0_14 = arith.constant 0 : index
    %c0_15 = arith.constant 0 : index
    %c0_16 = arith.constant 0 : index
    %17 = vector.load %arg5[%c0_14, %c0_15, %c0_16] : memref<1x1x1xf32, #tpu.memory_space<vmem>>, vector<1x1x1xf32>
    %18 = vector.shape_cast %17 : vector<1x1x1xf32> to vector<1x1xf32>
    %19 = vector.broadcast %18 : vector<1x1xf32> to vector<4x128xf32>
    %20 = arith.mulf %19, %6 : vector<4x128xf32>
    %21 = arith.addf %16, %20 : vector<4x128xf32>
    %cst_17 = arith.constant dense<0.000000e+00> : vector<4x128xf32>
    %22 = tpu.matmul %3, %21, %cst_17 {dimension_numbers = #tpu.dot_dimension_numbers<[1], [0], [0], [1], [0, 0, 1, 1], [], []>} : vector<4x4xf32>, vector<4x128xf32>, vector<4x128xf32> -> vector<4x128xf32>
    %23 = vector.broadcast %4 : vector<4x1xf32> to vector<4x128xf32>
    %24 = arith.addf %22, %23 : vector<4x128xf32>
    %25 = arith.subf %24, %6 : vector<4x128xf32>
    %26 = math.absf %25 : vector<4x128xf32>
    %c0_18 = arith.constant 0 : index
    %c0_19 = arith.constant 0 : index
    %c0_20 = arith.constant 0 : index
    %27 = vector.load %arg6[%c0_18, %c0_19, %c0_20] : memref<1x1x1xf32, #tpu.memory_space<vmem>>, vector<1x1x1xf32>
    %28 = vector.shape_cast %27 : vector<1x1x1xf32> to vector<1x1xf32>
    %29 = vector.broadcast %28 : vector<1x1xf32> to vector<4x128xf32>
    %30 = arith.mulf %26, %29 : vector<4x128xf32>
    %c0_21 = arith.constant 0 : index
    %c0_22 = arith.constant 0 : index
    %c0_23 = arith.constant 0 : index
    %31 = vector.load %arg9[%c0_21, %c0_22, %c0_23] : memref<1x4x128xf32, #tpu.memory_space<vmem>>, vector<1x4x128xf32>
    %32 = vector.shape_cast %31 : vector<1x4x128xf32> to vector<4x128xf32>
    %33 = arith.addf %32, %30 : vector<4x128xf32>
    %c0_24 = arith.constant 0 : index
    %c0_25 = arith.constant 0 : index
    %c0_26 = arith.constant 0 : index
    %34 = vector.load %arg9[%c0_24, %c0_25, %c0_26] : memref<1x4x128xf32, #tpu.memory_space<vmem>>, vector<1x4x128xf32>
    %35 = vector.shape_cast %34 : vector<1x4x128xf32> to vector<4x128xf32>
    %36 = vector.shape_cast %33 : vector<4x128xf32> to vector<1x4x128xf32>
    tpu.vector_store %arg9[%c0_24, %c0_25, %c0_26], %36 {strides = array<i32>} : memref<1x4x128xf32, #tpu.memory_space<vmem>>, vector<1x4x128xf32>,
    return
  }
  func.func @transform_0(%arg0: i32, %arg1: i32) -> (i32, i32, i32) {
    %c0_i32 = arith.constant 0 : i32
    %c0_i32_0 = arith.constant 0 : i32
    return %arg0, %c0_i32, %arg1 : i32, i32, i32
  }
  func.func @transform_1(%arg0: i32, %arg1: i32) -> (i32, i32, i32) {
    %c0_i32 = arith.constant 0 : i32
    %c0_i32_0 = arith.constant 0 : i32
    return %arg0, %c0_i32, %arg1 : i32, i32, i32
  }
  func.func @transform_2(%arg0: i32, %arg1: i32) -> (i32, i32, i32) {
    %c0_i32 = arith.constant 0 : i32
    %c0_i32_0 = arith.constant 0 : i32
    %c0_i32_1 = arith.constant 0 : i32
    return %arg0, %c0_i32, %c0_i32_0 : i32, i32, i32
  }
  func.func @transform_3(%arg0: i32, %arg1: i32) -> (i32, i32, i32) {
    %c0_i32 = arith.constant 0 : i32
    %c0_i32_0 = arith.constant 0 : i32
    %c0_i32_1 = arith.constant 0 : i32
    return %arg0, %c0_i32, %c0_i32_0 : i32, i32, i32
  }
  func.func @transform_4(%arg0: i32, %arg1: i32) -> (i32, i32, i32) {
    %c0_i32 = arith.constant 0 : i32
    %c0_i32_0 = arith.constant 0 : i32
    %c0_i32_1 = arith.constant 0 : i32
    return %arg0, %c0_i32, %c0_i32_0 : i32, i32, i32
  }
  func.func @transform_5(%arg0: i32, %arg1: i32) -> (i32, i32) {
    %c0_i32 = arith.constant 0 : i32
    %c0_i32_0 = arith.constant 0 : i32
    %c0_i32_1 = arith.constant 0 : i32
    return %c0_i32, %c0_i32_0 : i32, i32
  }
  func.func @transform_6(%arg0: i32, %arg1: i32) -> (i32, i32) {
    %c0_i32 = arith.constant 0 : i32
    %c0_i32_0 = arith.constant 0 : i32
    %c0_i32_1 = arith.constant 0 : i32
    return %c0_i32, %c0_i32_0 : i32, i32
  }
  func.func @transform_7(%arg0: i32, %arg1: i32) -> (i32, i32, i32) {
    %c0_i32 = arith.constant 0 : i32
    %c0_i32_0 = arith.constant 0 : i32
    %c0_i32_1 = arith.constant 0 : i32
    return %arg0, %c0_i32, %c0_i32_0 : i32, i32, i32
  }
}

</mosaic_0001>

<llo_original>
// kernel: tpu_custom_call.1
$region0: #{tpu_custom_call.1}
  #allocation0 [shape = 'u32[]', space=smem, size = 0x4, offset = 0x4, fixed_abs, tag = 'smem constant byte address 0x4 - core index']
  #allocation1 [shape = 'u32[144,128]{1,0:T(1,128)}', space=vmem, size = 0x12000, scoped, tag = 'internal scratch']
  %s0 = inlined_call_operand.vmem [shape: f32[2,4,256], index: 0, kind: input, shape index: {}]
  %s1 = inlined_call_operand.hbm [shape: f32[2,4,256], index: 1, kind: input, shape index: {}]
  %s2 = inlined_call_operand.vmem [shape: f32[2,1,1], index: 2, kind: input, shape index: {}]
  %s3 = inlined_call_operand.vmem [shape: f32[2,1,1], index: 3, kind: input, shape index: {}]
  %s4 = inlined_call_operand.vmem [shape: f32[2,1,1], index: 4, kind: input, shape index: {}]
  %s5 = inlined_call_operand.vmem [shape: f32[4,4], index: 5, kind: input, shape index: {}]
  %s6 = inlined_call_operand.vmem [shape: f32[4,1], index: 6, kind: input, shape index: {}]
  %s7 = inlined_call_operand.hbm [shape: f32[2,4,128], index: 7, kind: output, shape index: {}]
  %s8 = sld [smem:[#allocation0]]
  $region69: #{tpu_custom_call.1} parent=0
    _
  %s10 = ssub.s32 1, %s8
  %s11 = scalar_select 0, %s10, %s8
  $region1: #{tpu_custom_call.1} parent=0
    #allocation2 [shape = 'u8[4096]{0}', space=vmem, size = 0x1000, scoped, tag = 'input window, operand 1']
    #allocation3 [shape = 's32[2]{0}', space=sflag, size = 0x8, scoped, tag = 'scoped memory for tpu_custom_call.1']
    #allocation4 [shape = 's32[2]{0}', space=sflag, size = 0x8, scoped, tag = 'scoped memory for tpu_custom_call.1']
    #allocation5 [shape = 'u8[4096]{0}', space=vmem, size = 0x1000, scoped, tag = 'output window, operand 0']
    %12 = vsyncpa [#allocation3], 0
    %s13 = scalar_lea.sflag [#allocation3], 1
    %14 = vsyncpa %s13, 0
    %15 = vsyncpa [#allocation4], 0
    %s16 = scalar_lea.sflag [#allocation4], 1
    %17 = vsyncpa %s16, 0
    loop: start=0, step=1, limit=6
    $region2: #{tpu_custom_call.1} parent=1 // loop_pre_header
      _
    $region3: #{tpu_custom_call.1} parent=1 // loop_header
      %s19 = sphi 0, %s23
      %p20 = scmp.ge.s32.totalorder %s19, 6
      %s26 = sphi 0, %s38
      %s27 = sphi 0, %s34
      %s28 = sphi 0, %s26
      %s29 = sphi 0, %s27
      %s30 = sphi 0, %s28
      %s31 = sphi 0, %s29
      %s43 = sphi 0, %s45
      %s46 = sphi 0, %s43
      %s47 = sphi 0, %s46
      %s63 = sphi 0, %s47
      %s71 = sphi 0, %s73
      %s74 = sphi 0, %s71
      %s75 = sphi 0, %s74
      %s91 = sphi 0, %s75
      %s97 = sphi 0, %s99
      %s100 = sphi 0, %s97
      %s101 = sphi 0, %s100
      %s117 = sphi 0, %s101
      %s123 = sphi 0, %s125
      %s126 = sphi 0, %s123
      %s127 = sphi 0, %s126
      %s143 = sphi 0, %s127
      %s149 = sphi 0, %s151
      %s152 = sphi 0, %s149
      %s153 = sphi 0, %s152
      %s169 = sphi 0, %s153
      %s173 = sphi 0, %s173
      %s175 = sphi 0, %s173
      %s176 = sphi 0, %s175
      %s190 = sphi 0, %s176
      %s194 = sphi 0, %s194
      %s196 = sphi 0, %s194
      %s197 = sphi 0, %s196
      %s211 = sphi 0, %s197
      %s217 = sphi 0, %s219
      %s220 = sphi 0, %s217
      %s221 = sphi 0, %s220
      %s237 = sphi 0, %s221
    $region4: #{tpu_custom_call.1} parent=1 // loop_header_branch
      %22 = sbr.rel (%p20) target = $region8
    $region5: #{tpu_custom_call.1} parent=1 // loop_body
      %s24 = ssub.s32 %s19, 1
      %s25 = ssub.s32 %s19, 2
      %s32 = sadd.s32 1, %s27
      %p33 = scmp.ge.s32.totalorder %s32, 2
      %s34 = scalar_select %p33, 0, %s32
      %s35 = sadd.s32 1, %s26
      %s36 = scalar_select %p33, %s35, %s26
      %p37 = scmp.ge.s32.totalorder %s36, 2
      %s38 = scalar_select %p37, 0, %s36
      %s39 = ssub.s32 %s26, %s38
      %s40 = ssub.s32 %s27, %s34
      %s41 = sor.u32 %s39, %s40
      %p42 = scmp.eq.s32.totalorder %s41, 0
      %s44 = sadd.s32 %s43, 1
      %s45 = scalar_select %p42, %s43, %s44
      %p48 = pneg %p42
      %p49 = scmp.eq.s32.totalorder %s19, 3
      %p50 = por %p48, %p49
      %p51 = scmp.ne.s32.totalorder %s43, %s46
      %p52 = scmp.eq.s32.totalorder %s19, 0
      %p53 = por %p51, %p52
      %p54 = scmp.ne.s32.totalorder %s43, %s46
      %p55 = scmp.eq.s32.totalorder %s24, 3
      %p56 = por %p54, %p55
      %p57 = scmp.ne.s32.totalorder %s46, %s47
      %p58 = scmp.eq.s32.totalorder %s24, 0
      %p59 = por %p57, %p58
      %p60 = scmp.ne.s32.totalorder %s46, %s47
      %p61 = scmp.eq.s32.totalorder %s25, 3
      %p62 = por %p60, %p61
      %p64 = scmp.ne.s32.totalorder %s47, %s63
      %p65 = scmp.eq.s32.totalorder %s25, 0
      %p66 = por %p64, %p65
      %s67 = ssub.s32 %s26, %s38
      %s68 = ssub.s32 %s27, %s34
      %s69 = sor.u32 %s67, %s68
      %p70 = scmp.eq.s32.totalorder %s69, 0
      %s72 = sadd.s32 %s71, 1
      %s73 = scalar_select %p70, %s71, %s72
      %p76 = pneg %p70
      %p77 = scmp.eq.s32.totalorder %s19, 3
      %p78 = por %p76, %p77
      %p79 = scmp.ne.s32.totalorder %s71, %s74
      %p80 = scmp.eq.s32.totalorder %s19, 0
      %p81 = por %p79, %p80
      %p82 = scmp.ne.s32.totalorder %s71, %s74
      %p83 = scmp.eq.s32.totalorder %s24, 3
      %p84 = por %p82, %p83
      %p85 = scmp.ne.s32.totalorder %s74, %s75
      %p86 = scmp.eq.s32.totalorder %s24, 0
      %p87 = por %p85, %p86
      %p88 = scmp.ne.s32.totalorder %s74, %s75
      %p89 = scmp.eq.s32.totalorder %s25, 3
      %p90 = por %p88, %p89
      %p92 = scmp.ne.s32.totalorder %s75, %s91
      %p93 = scmp.eq.s32.totalorder %s25, 0
      %p94 = por %p92, %p93
      %s95 = ssub.s32 %s26, %s38
      %p96 = scmp.eq.s32.totalorder %s95, 0
      %s98 = sadd.s32 %s97, 1
      %s99 = scalar_select %p96, %s97, %s98
      %p102 = pneg %p96
      %p103 = scmp.eq.s32.totalorder %s19, 3
      %p104 = por %p102, %p103
      %p105 = scmp.ne.s32.totalorder %s97, %s100
      %p106 = scmp.eq.s32.totalorder %s19, 0
      %p107 = por %p105, %p106
      %p108 = scmp.ne.s32.totalorder %s97, %s100
      %p109 = scmp.eq.s32.totalorder %s24, 3
      %p110 = por %p108, %p109
      %p111 = scmp.ne.s32.totalorder %s100, %s101
      %p112 = scmp.eq.s32.totalorder %s24, 0
      %p113 = por %p111, %p112
      %p114 = scmp.ne.s32.totalorder %s100, %s101
      %p115 = scmp.eq.s32.totalorder %s25, 3
      %p116 = por %p114, %p115
      %p118 = scmp.ne.s32.totalorder %s101, %s117
      %p119 = scmp.eq.s32.totalorder %s25, 0
      %p120 = por %p118, %p119
      %s121 = ssub.s32 %s26, %s38
      %p122 = scmp.eq.s32.totalorder %s121, 0
      %s124 = sadd.s32 %s123, 1
      %s125 = scalar_select %p122, %s123, %s124
      %p128 = pneg %p122
      %p129 = scmp.eq.s32.totalorder %s19, 3
      %p130 = por %p128, %p129
      %p131 = scmp.ne.s32.totalorder %s123, %s126
      %p132 = scmp.eq.s32.totalorder %s19, 0
      %p133 = por %p131, %p132
      %p134 = scmp.ne.s32.totalorder %s123, %s126
      %p135 = scmp.eq.s32.totalorder %s24, 3
      %p136 = por %p134, %p135
      %p137 = scmp.ne.s32.totalorder %s126, %s127
      %p138 = scmp.eq.s32.totalorder %s24, 0
      %p139 = por %p137, %p138
      %p140 = scmp.ne.s32.totalorder %s126, %s127
      %p141 = scmp.eq.s32.totalorder %s25, 3
      %p142 = por %p140, %p141
      %p144 = scmp.ne.s32.totalorder %s127, %s143
      %p145 = scmp.eq.s32.totalorder %s25, 0
      %p146 = por %p144, %p145
      %s147 = ssub.s32 %s26, %s38
      %p148 = scmp.eq.s32.totalorder %s147, 0
      %s150 = sadd.s32 %s149, 1
      %s151 = scalar_select %p148, %s149, %s150
      %p154 = pneg %p148
      %p155 = scmp.eq.s32.totalorder %s19, 3
      %p156 = por %p154, %p155
      %p157 = scmp.ne.s32.totalorder %s149, %s152
      %p158 = scmp.eq.s32.totalorder %s19, 0
      %p159 = por %p157, %p158
      %p160 = scmp.ne.s32.totalorder %s149, %s152
      %p161 = scmp.eq.s32.totalorder %s24, 3
      %p162 = por %p160, %p161
      %p163 = scmp.ne.s32.totalorder %s152, %s153
      %p164 = scmp.eq.s32.totalorder %s24, 0
      %p165 = por %p163, %p164
      %p166 = scmp.ne.s32.totalorder %s152, %s153
      %p167 = scmp.eq.s32.totalorder %s25, 3
      %p168 = por %p166, %p167
      %p170 = scmp.ne.s32.totalorder %s153, %s169
      %p171 = scmp.eq.s32.totalorder %s25, 0
      %p172 = por %p170, %p171
      %s174 = sadd.s32 %s173, 1
      %p177 = scmp.eq.s32.totalorder %s19, 3
      %p178 = scmp.ne.s32.totalorder %s173, %s175
      %p179 = scmp.eq.s32.totalorder %s19, 0
      %p180 = por %p178, %p179
      %p181 = scmp.ne.s32.totalorder %s173, %s175
      %p182 = scmp.eq.s32.totalorder %s24, 3
      %p183 = por %p181, %p182
      %p184 = scmp.ne.s32.totalorder %s175, %s176
      %p185 = scmp.eq.s32.totalorder %s24, 0
      %p186 = por %p184, %p185
      %p187 = scmp.ne.s32.totalorder %s175, %s176
      %p188 = scmp.eq.s32.totalorder %s25, 3
      %p189 = por %p187, %p188
      %p191 = scmp.ne.s32.totalorder %s176, %s190
      %p192 = scmp.eq.s32.totalorder %s25, 0
      %p193 = por %p191, %p192
      %s195 = sadd.s32 %s194, 1
      %p198 = scmp.eq.s32.totalorder %s19, 3
      %p199 = scmp.ne.s32.totalorder %s194, %s196
      %p200 = scmp.eq.s32.totalorder %s19, 0
      %p201 = por %p199, %p200
      %p202 = scmp.ne.s32.totalorder %s194, %s196
      %p203 = scmp.eq.s32.totalorder %s24, 3
      %p204 = por %p202, %p203
      %p205 = scmp.ne.s32.totalorder %s196, %s197
      %p206 = scmp.eq.s32.totalorder %s24, 0
      %p207 = por %p205, %p206
      %p208 = scmp.ne.s32.totalorder %s196, %s197
      %p209 = scmp.eq.s32.totalorder %s25, 3
      %p210 = por %p208, %p209
      %p212 = scmp.ne.s32.totalorder %s197, %s211
      %p213 = scmp.eq.s32.totalorder %s25, 0
      %p214 = por %p212, %p213
      %s215 = ssub.s32 %s26, %s38
      %p216 = scmp.eq.s32.totalorder %s215, 0
      %s218 = sadd.s32 %s217, 1
      %s219 = scalar_select %p216, %s217, %s218
      %p222 = pneg %p216
      %p223 = scmp.eq.s32.totalorder %s19, 3
      %p224 = por %p222, %p223
      %p225 = scmp.ne.s32.totalorder %s217, %s220
      %p226 = scmp.eq.s32.totalorder %s19, 0
      %p227 = por %p225, %p226
      %p228 = scmp.ne.s32.totalorder %s217, %s220
      %p229 = scmp.eq.s32.totalorder %s24, 3
      %p230 = por %p228, %p229
      %p231 = scmp.ne.s32.totalorder %s220, %s221
      %p232 = scmp.eq.s32.totalorder %s24, 0
      %p233 = por %p231, %p232
      %p234 = scmp.ne.s32.totalorder %s220, %s221
      %p235 = scmp.eq.s32.totalorder %s25, 3
      %p236 = por %p234, %p235
      %p238 = scmp.ne.s32.totalorder %s221, %s237
      %p239 = scmp.eq.s32.totalorder %s25, 0
      %p240 = por %p238, %p239
      %p241 = scmp.le.s32.totalorder 1, %s19
      %p242 = scmp.lt.s32.totalorder %s19, 5
      %p243 = pnand %p241, %p242
      %p244 = pneg %p243
      // Predicated region
      $region9: #{tpu_custom_call.1} parent=5 // pred_check
        _
      $region10: #{tpu_custom_call.1} parent=5 // pred_check_branch
        %246 = sbr.rel (%p243) target = $region12
      $region11: #{tpu_custom_call.1} parent=5 // pred_region
        %s247 = ssub.s32 %s19, 1
        // Predicated region
        $region13: #{tpu_custom_call.1} parent=11 // pred_check
          %p248 = pneg %p186
        $region14: #{tpu_custom_call.1} parent=11 // pred_check_branch
          %250 = sbr.rel (%p248) target = $region16
        $region15: #{tpu_custom_call.1} parent=11 // pred_region
          _
        $region16: #{tpu_custom_call.1} parent=11 // pred_fallthru
          _
        // Predicated region
        $region17: #{tpu_custom_call.1} parent=11 // pred_check
          %p251 = pneg %p207
        $region18: #{tpu_custom_call.1} parent=11 // pred_check_branch
          %253 = sbr.rel (%p251) target = $region20
        $region19: #{tpu_custom_call.1} parent=11 // pred_region
          _
        $region20: #{tpu_custom_call.1} parent=11 // pred_fallthru
          _
      $region12: #{tpu_custom_call.1} parent=5 // pred_fallthru
        _
      %p254 = scmp.lt.s32.totalorder %s19, 4
      // Predicated region
      $region21: #{tpu_custom_call.1} parent=5 // pred_check
        %p255 = pneg %p254
      $region22: #{tpu_custom_call.1} parent=5 // pred_check_branch
        %257 = sbr.rel (%p255) target = $region24
      $region23: #{tpu_custom_call.1} parent=5 // pred_region
        // Predicated region
        $region25: #{tpu_custom_call.1} parent=23 // pred_check
          %p258 = pneg %p53
        $region26: #{tpu_custom_call.1} parent=23 // pred_check_branch
          %260 = sbr.rel (%p258) target = $region28
        $region27: #{tpu_custom_call.1} parent=23 // pred_region
          %p261 = scmp.lt.s32.totalorder %s26, 1
          %s262 = scalar_select %p261, %s26, 1
          %p263 = scmp.lt.s32.totalorder %s27, 1
          %s264 = scalar_select %p263, %s27, 1
          %s265 = smul.addr %s262, 2
          %s266 = sadd.s32 %s264, %s265
          %s267 = smul.addr %s266, 4
          %s268 = scalar_lea.vmem %s0, %s267
        $region28: #{tpu_custom_call.1} parent=23 // pred_fallthru
          _
        // Predicated region
        $region29: #{tpu_custom_call.1} parent=23 // pred_check
          %p269 = pneg %p81
        $region30: #{tpu_custom_call.1} parent=23 // pred_check_branch
          %271 = sbr.rel (%p269) target = $region32
        $region31: #{tpu_custom_call.1} parent=23 // pred_region
          %s272 = sand.u32 %s71, 1
          %s273 = scalar_lea.sflag [#allocation3], %s272
          %s274 = sand.u32 %s71, 1
          %s275 = smul.addr %s274, 4
          %s276 = scalar_lea.vmem [#allocation2], %s275
          %s278 = ssub.s32 64, 64
          %279 = vsyncadd %s273, %s278
          %s280 = smul.addr %s26, 2
          %s281 = sadd.s32 %s27, %s280
          %s282 = smul.addr %s281, 64
          %s283 = scalar_lea.hbm %s1, %s282
          %s285 = sshll.u32 %s276, 4
          %s286 = int_to_ptr.vmem [resolvable:$true] %s285
          %288 = dma.hbm_to_vmem [thread:$0]  %s283, 64, %s286, %s273
        $region32: #{tpu_custom_call.1} parent=23 // pred_fallthru
          _
        // Predicated region
        $region33: #{tpu_custom_call.1} parent=23 // pred_check
          %p289 = pneg %p107
        $region34: #{tpu_custom_call.1} parent=23 // pred_check_branch
          %291 = sbr.rel (%p289) target = $region36
        $region35: #{tpu_custom_call.1} parent=23 // pred_region
          %p292 = scmp.lt.s32.totalorder %s26, 1
          %s293 = scalar_select %p292, %s26, 1
          %s294 = scalar_lea.vmem %s2, %s293
        $region36: #{tpu_custom_call.1} parent=23 // pred_fallthru
          _
        // Predicated region
        $region37: #{tpu_custom_call.1} parent=23 // pred_check
          %p295 = pneg %p133
        $region38: #{tpu_custom_call.1} parent=23 // pred_check_branch
          %297 = sbr.rel (%p295) target = $region40
        $region39: #{tpu_custom_call.1} parent=23 // pred_region
          %p298 = scmp.lt.s32.totalorder %s26, 1
          %s299 = scalar_select %p298, %s26, 1
          %s300 = scalar_lea.vmem %s3, %s299
        $region40: #{tpu_custom_call.1} parent=23 // pred_fallthru
          _
        // Predicated region
        $region41: #{tpu_custom_call.1} parent=23 // pred_check
          %p301 = pneg %p159
        $region42: #{tpu_custom_call.1} parent=23 // pred_check_branch
          %303 = sbr.rel (%p301) target = $region44
        $region43: #{tpu_custom_call.1} parent=23 // pred_region
          %p304 = scmp.lt.s32.totalorder %s26, 1
          %s305 = scalar_select %p304, %s26, 1
          %s306 = scalar_lea.vmem %s4, %s305
        $region44: #{tpu_custom_call.1} parent=23 // pred_fallthru
          _
      $region24: #{tpu_custom_call.1} parent=5 // pred_fallthru
        _
      %p307 = scmp.le.s32.totalorder 1, %s19
      %p308 = scmp.lt.s32.totalorder %s19, 5
      %p309 = pnand %p307, %p308
      %p310 = pneg %p309
      // Predicated region
      $region45: #{tpu_custom_call.1} parent=5 // pred_check
        _
      $region46: #{tpu_custom_call.1} parent=5 // pred_check_branch
        %312 = sbr.rel (%p309) target = $region48
      $region47: #{tpu_custom_call.1} parent=5 // pred_region
        %s313 = ssub.s32 %s19, 1
        %s314 = sand.u32 %s74, 1
        %s315 = scalar_lea.sflag [#allocation3], %s314
        %s316 = sand.u32 %s74, 1
        %s317 = smul.addr %s316, 4
        %s318 = scalar_lea.vmem [#allocation2], %s317
        // Predicated region
        $region49: #{tpu_custom_call.1} parent=47 // pred_check
          %p319 = pneg %p87
        $region50: #{tpu_custom_call.1} parent=47 // pred_check_branch
          %321 = sbr.rel (%p319) target = $region52
        $region51: #{tpu_custom_call.1} parent=47 // pred_region
          %322 = dma.done %s315, 64
        $region52: #{tpu_custom_call.1} parent=47 // pred_fallthru
          _
        %p323 = scmp.lt.s32.totalorder %s28, 1
        %s324 = scalar_select %p323, %s28, 1
        %p325 = scmp.lt.s32.totalorder %s29, 1
        %s326 = scalar_select %p325, %s29, 1
        %s327 = smul.addr %s324, 2
        %s328 = sadd.s32 %s326, %s327
        %s329 = smul.addr %s328, 4
        %s330 = scalar_lea.vmem %s0, %s329
        %p331 = pneg %p59
        %p332 = pneg %p56
        %s333 = sand.u32 %s74, 1
        %s334 = scalar_lea.sflag [#allocation3], %s333
        %s335 = sand.u32 %s74, 1
        %s336 = smul.addr %s335, 4
        %s337 = scalar_lea.vmem [#allocation2], %s336
        %p338 = pneg %p87
        %p339 = pneg %p84
        %p340 = scmp.lt.s32.totalorder %s28, 1
        %s341 = scalar_select %p340, %s28, 1
        %s342 = scalar_lea.vmem %s2, %s341
        %p343 = pneg %p113
        %p344 = pneg %p110
        %p345 = scmp.lt.s32.totalorder %s28, 1
        %s346 = scalar_select %p345, %s28, 1
        %s347 = scalar_lea.vmem %s3, %s346
        %p348 = pneg %p139
        %p349 = pneg %p136
        %p350 = scmp.lt.s32.totalorder %s28, 1
        %s351 = scalar_select %p350, %s28, 1
        %s352 = scalar_lea.vmem %s4, %s351
        %p353 = pneg %p165
        %p354 = pneg %p162
        %p355 = pneg %p186
        %p356 = pneg %p183
        %p357 = pneg %p207
        %p358 = pneg %p204
        %p359 = pneg %p233
        %p360 = pneg %p230
        %s361 = sand.u32 %s220, 1
        %s362 = scalar_lea.sflag [#allocation4], %s361
        %s363 = sand.u32 %s220, 1
        %s364 = smul.addr %s363, 4
        %s365 = scalar_lea.vmem [#allocation5], %s364
        %p366 = scmp.lt.s32.totalorder %s28, 1
        %s367 = scalar_select %p366, %s28, 1
        %p368 = scmp.lt.s32.totalorder %s29, 1
        %s369 = scalar_select %p368, %s29, 1
        %s370 = smul.addr %s367, 2
        %s371 = sadd.s32 %s369, %s370
        %s372 = smul.addr %s371, 4
        %s373 = scalar_lea.vmem %s0, %s372
        %p374 = scmp.lt.s32.totalorder %s28, 1
        %s375 = scalar_select %p374, %s28, 1
        %s376 = scalar_lea.vmem %s2, %s375
        %p377 = scmp.lt.s32.totalorder %s28, 1
        %s378 = scalar_select %p377, %s28, 1
        %s379 = scalar_lea.vmem %s3, %s378
        %p380 = scmp.lt.s32.totalorder %s28, 1
        %s381 = scalar_select %p380, %s28, 1
        %s382 = scalar_lea.vmem %s4, %s381
        %p383 = scmp.eq.s32.totalorder %s29, 0
        // Predicated region
        $region53: #{tpu_custom_call.1} parent=47 // pred_check
          %p384 = pneg %p383
        $region54: #{tpu_custom_call.1} parent=47 // pred_check_branch
          %386 = sbr.rel (%p384) target = $region56
        $region55: #{tpu_custom_call.1} parent=47 // pred_region
          %387 = vst [vmem:[%s365] sm:$0xf] 0.0
        $region56: #{tpu_custom_call.1} parent=47 // pred_fallthru
          _
        %v388 = vld [vmem:[%s5] sm:$0xf]
        %v389 = vld [vmem:[%s6] sm:$0xf]
        %v390 = vld [vmem:[%s318] sm:$0xf]
        %v391 = vld [vmem:[%s373] sm:$0xf]
        %v392 = vmul.f32 %v391, 2.0
        %v393 = vsub.f32 %v392, 1.0
        %v394 = vld [vmem:[%s376] sm:$0x1]
        %v396 = vlaneseq
        %v397 = vshrl.u32 %v396, 7
        %v398 = vsub.s32 0, %v397
        %v399 = vrot.slane %v394, %v398
        %400 = vset.pattern.permute.xlu0 0
        %401 = vperm.xlu0 %400, %v399
        %v402 = vpop.permute.xlu0 %401
        %v404 = vmul.f32 %v402, %v393
        %v405 = vld [vmem:[%s379] sm:$0x1]
        %v407 = vlaneseq
        %v408 = vshrl.u32 %v407, 7
        %v409 = vsub.s32 0, %v408
        %v410 = vrot.slane %v405, %v409
        %411 = vset.pattern.permute.xlu0 0
        %412 = vperm.xlu0 %411, %v410
        %v413 = vpop.permute.xlu0 %412
        %v415 = vmul.f32 %v413, %v390
        %v416 = vadd.f32 %v404, %v415
        %418 = vset.pattern.permute.xlu0 0
        %419 = vperm.xlu0 %418, %v389
        %v420 = vpop.permute.xlu0 %419
        %vm422 = vcmask 31744
        %v424 = vsel %vm422, %v388, 0
        %vm426 = vcmask 1043456
        %v428 = vsel %vm426, %v416, 0
        %430 = vmatprep.subr.mxu0 0.0
        %431 = vmatpush1.msra.mxu0 %v428
        %432 = vmatprep.subr.mxu0 0.0
        %433 = vmatpush1.msra.mxu0 0.0
        %434 = vmatprep.subr.mxu0 0.0
        %435 = vmatpush1.msra.mxu0 0.0
        %436 = vmatprep.subr.mxu0 0.0
        %437 = vmatpush1.msra.mxu0 0.0
        %438 = vmatprep.subr.mxu0 0.0
        %439 = vmatpush1.msra.mxu0 0.0
        %440 = vmatprep.subr.mxu0 0.0
        %441 = vmatpush1.msra.mxu0 0.0
        %442 = vmatprep.subr.mxu0 0.0
        %443 = vmatpush1.msra.mxu0 0.0
        %444 = vmatprep.subr.mxu0 0.0
        %445 = vmatpush1.msra.mxu0 0.0
        %446 = vmatprep.subr.mxu0 0.0
        %447 = vmatpush1.msra.mxu0 0.0
        %448 = vmatprep.subr.mxu0 0.0
        %449 = vmatpush1.msra.mxu0 0.0
        %450 = vmatprep.subr.mxu0 0.0
        %451 = vmatpush1.msra.mxu0 0.0
        %452 = vmatprep.subr.mxu0 0.0
        %453 = vmatpush1.msra.mxu0 0.0
        %454 = vmatprep.subr.mxu0 0.0
        %455 = vmatpush1.msra.mxu0 0.0
        %456 = vmatprep.subr.mxu0 0.0
        %457 = vmatpush1.msra.mxu0 0.0
        %458 = vmatprep.subr.mxu0 0.0
        %459 = vmatpush1.msra.mxu0 0.0
        %460 = vmatprep.subr.mxu0 0.0
        %461 = vmatpush1.msra.mxu0 0.0
        %462 = vmatprep.subr.mxu0 0.0
        %463 = vmatpush1.msra.mxu0 0.0
        %464 = vmatprep.subr.mxu0 0.0
        %465 = vmatpush1.msra.mxu0 0.0
        %466 = vmatprep.subr.mxu0 0.0
        %467 = vmatpush1.msra.mxu0 0.0
        %468 = vmatprep.subr.mxu0 0.0
        %469 = vmatpush1.msra.mxu0 0.0
        %470 = vmatprep.subr.mxu0 0.0
        %471 = vmatpush1.msra.mxu0 0.0
        %472 = vmatprep.subr.mxu0 0.0
        %473 = vmatpush1.msra.mxu0 0.0
        %474 = vmatprep.subr.mxu0 0.0
        %475 = vmatpush1.msra.mxu0 0.0
        %476 = vmatprep.subr.mxu0 0.0
        %477 = vmatpush1.msra.mxu0 0.0
        %478 = vmatprep.subr.mxu0 0.0
        %479 = vmatpush1.msra.mxu0 0.0
        %480 = vmatprep.subr.mxu0 0.0
        %481 = vmatpush1.msra.mxu0 0.0
        %482 = vmatprep.subr.mxu0 0.0
        %483 = vmatpush1.msra.mxu0 0.0
        %484 = vmatprep.subr.mxu0 0.0
        %485 = vmatpush1.msra.mxu0 0.0
        %486 = vmatprep.subr.mxu0 0.0
        %487 = vmatpush1.msra.mxu0 0.0
        %488 = vmatprep.subr.mxu0 0.0
        %489 = vmatpush1.msra.mxu0 0.0
        %490 = vmatprep.subr.mxu0 0.0
        %491 = vmatpush1.msra.mxu0 0.0
        %492 = vmatprep.subr.mxu0 0.0
        %493 = vmatpush1.msra.mxu0 0.0
        %494 = vmatprep.mubr.f32.mxu0 0.0
        %495 = vmatmul.mubr.f32.gmra.mrb[0].mxu0 %v424
        %v496 = vpop.f32.mrb[0].mxu0
        %v497 = vadd.f32 %v420, %v496
        %v498 = vpop.f32.mrb[0].mxu0
        %499 = vdwg.mxu0
        %v500 = vsub.f32 %v497, %v390
        %v501 = vand.u32 2147483647, %v500
        %v502 = vld [vmem:[%s382] sm:$0x1]
        %v504 = vlaneseq
        %v505 = vshrl.u32 %v504, 7
        %v506 = vsub.s32 0, %v505
        %v507 = vrot.slane %v502, %v506
        %508 = vset.pattern.permute.xlu0 0
        %509 = vperm.xlu0 %508, %v507
        %v510 = vpop.permute.xlu0 %509
        %v512 = vmul.f32 %v501, %v510
        %v513 = vld [vmem:[%s365] sm:$0xf]
        %v514 = vadd.f32 %v513, %v512
        %515 = vst [vmem:[%s365] sm:$0xf] %v514
        %s516 = sand.u32 %s220, 1
        %s517 = scalar_lea.sflag [#allocation4], %s516
        %s518 = sand.u32 %s220, 1
        %s519 = smul.addr %s518, 4
        %s520 = scalar_lea.vmem [#allocation5], %s519
        // Predicated region
        $region57: #{tpu_custom_call.1} parent=47 // pred_check
          %p521 = pneg %p230
        $region58: #{tpu_custom_call.1} parent=47 // pred_check_branch
          %523 = sbr.rel (%p521) target = $region60
        $region59: #{tpu_custom_call.1} parent=47 // pred_region
          %s525 = ssub.s32 64, 64
          %526 = vsyncadd %s517, %s525
          %s527 = smul.addr %s28, 64
          %s528 = scalar_lea.hbm %s7, %s527
          %s530 = sshll.u32 %s520, 4
          %s531 = int_to_ptr.vmem [resolvable:$true] %s530
          %533 = dma.vmem_to_hbm [thread:$0]  %s531, 64, %s528, %s517
        $region60: #{tpu_custom_call.1} parent=47 // pred_fallthru
          _
      $region48: #{tpu_custom_call.1} parent=5 // pred_fallthru
        _
      %p534 = scmp.le.s32.totalorder 2, %s19
      // Predicated region
      $region61: #{tpu_custom_call.1} parent=5 // pred_check
        %p535 = pneg %p534
      $region62: #{tpu_custom_call.1} parent=5 // pred_check_branch
        %537 = sbr.rel (%p535) target = $region64
      $region63: #{tpu_custom_call.1} parent=5 // pred_region
        %s538 = ssub.s32 %s19, 2
        // Predicated region
        $region65: #{tpu_custom_call.1} parent=63 // pred_check
          %p539 = pneg %p236
        $region66: #{tpu_custom_call.1} parent=63 // pred_check_branch
          %541 = sbr.rel (%p539) target = $region68
        $region67: #{tpu_custom_call.1} parent=63 // pred_region
          %s542 = sand.u32 %s221, 1
          %s543 = scalar_lea.sflag [#allocation4], %s542
          %s544 = sand.u32 %s221, 1
          %s545 = smul.addr %s544, 4
          %s546 = scalar_lea.vmem [#allocation5], %s545
          %547 = dma.done %s543, 64
        $region68: #{tpu_custom_call.1} parent=63 // pred_fallthru
          _
      $region64: #{tpu_custom_call.1} parent=5 // pred_fallthru
        _
    $region6: #{tpu_custom_call.1} parent=1 // loop_footer
      %s23 = sadd.s32 1, %s19
    $region7: #{tpu_custom_call.1} parent=1 // loop_footer_branch
      %18 = sbr.rel target = $region3
    $region8: #{tpu_custom_call.1} parent=1 // loop_exit
      _
    %548 = vsyncpa [#allocation3], 1
    %s549 = scalar_lea.sflag [#allocation3], 1
    %550 = vsyncpa %s549, 1
    %551 = vsyncpa [#allocation4], 1
    %s552 = scalar_lea.sflag [#allocation4], 1
    %553 = vsyncpa %s552, 1

</llo_original>
